<compile_context>
chip_gen: v5e
topology: v5e:2x2
jax: 0.10.0
libtpu: 0.0.40
codegen_flags: <defaults>
</compile_context>

<pallas_src>
import jax
import jax.numpy as jnp
from jax import lax
from jax.experimental import pallas as pl
from jax.experimental.pallas import tpu as pltpu

LANES = 128
SUBLANES = 8
MAX_TILE_ROWS = 8192                      # (8192,128) f32 = 4 MiB / input / buffer slot
VMEM_LIMIT_BYTES = 40 * 1024 * 1024       # > v5e's 16 MiB default, < v7x's 64 MiB physical


def _row_align(dtype):
    """Native sublane packing: f32 -> 8 rows, bf16/f16 -> 16, int8/fp8 -> 32."""
    itemsize = jnp.dtype(dtype).itemsize
    return SUBLANES * max(1, 4 // max(1, itemsize))


def _fold(x_f32):
    """(rows,128) f32 -> (8,128) partial sums; leading-axis reduce stays on the VPU."""
    rows = x_f32.shape[0]
    return jnp.sum(x_f32.reshape(rows // SUBLANES, SUBLANES, LANES), axis=0)


def _plan(rows_total, align):
    """Static tiling plan for a (rows_total, 128) slab. None -> too small, use XLA."""
    if rows_total < align:
        return None
    tr = min(MAX_TILE_ROWS, (rows_total // align) * align)   # multiple of align (and 8)
    num_tiles = pl.cdiv(rows_total, tr)
    shards = 2 if num_tiles >= 2 else 1                       # feed both v7x TensorCores
    tps = pl.cdiv(num_tiles, shards)                          # tiles per shard
    return tr, num_tiles, shards, tps


def _streaming_partials(slabs, rows_total, tr, num_tiles, shards, tps):
    """Stream (rows_total,128) slab tiles through a reduction kernel.

    Returns a (shards, 8, 128) float32 array of partial sums of
    sum(slabs[0]) - sum(slabs[1]) (fused, 2 inputs) or sum(slabs[0]) (1 input).
    Ragged last tiles and shard over-coverage are masked in-kernel, so the
    whole slab is consumed in a single pass.
    """
    fused = len(slabs) == 2
    needs_mask = (num_tiles * tr != rows_total) or (shards * tps != num_tiles)
    needs_clamp = shards * tps != num_tiles

    def kernel(*refs):
        in_refs, res_ref = refs[:-1], refs[-1]
        c = pl.program_id(0)
        i = pl.program_id(1)

        @pl.when(i == 0)
        def _():
            res_ref[...] = jnp.zeros_like(res_ref)

        x = in_refs[0][...].astype(jnp.float32)
        if fused:
            x = x - in_refs[1][...].astype(jnp.float32)
        if needs_mask:
            # rows past the end of the slab (boundary tile / over-covered shard)
            # contribute zero.  Cheap VPU compare+select, hidden under the DMA.
            valid = rows_total - (c * tps + i) * tr
            row_ids = lax.broadcasted_iota(jnp.int32, (tr, LANES), 0)
            x = jnp.where(row_ids < valid, x, jnp.float32(0))
        res_ref[...] += _fold(x)

    if needs_clamp:
        idx_map = lambda c, i: (jnp.minimum(c * tps + i, num_tiles - 1), 0)
    else:
        idx_map = lambda c, i: (c * tps + i, 0)

    return pl.pallas_call(
        kernel,
        out_shape=jax.ShapeDtypeStruct((shards, SUBLANES, LANES), jnp.float32),
        grid_spec=pltpu.PrefetchScalarGridSpec(
            num_scalar_prefetch=0,
            grid=(shards, tps),
            in_specs=[pl.BlockSpec((tr, LANES), idx_map) for _ in slabs],
            # Per-shard resident (8,128) accumulator; lane-dense output.
            out_specs=pl.BlockSpec((None, SUBLANES, LANES), lambda c, i: (c, 0, 0)),
        ),
        compiler_params=pltpu.CompilerParams(
            dimension_semantics=("parallel", "arbitrary"),
            vmem_limit_bytes=VMEM_LIMIT_BYTES,
        ),
    )(*slabs)


def _slab_and_tail(flat):
    """Split flat into a lane-dense (rows,128) native-dtype slab + a <128-elem tail."""
    n = flat.shape[0]
    rows_total = n // LANES
    slab_elems = rows_total * LANES
    if rows_total == 0:
        return None, flat
    # When n is a multiple of 128 this is a free bitcast of the contiguous buffer;
    # otherwise XLA may materialize the prefix slice (only hit for ragged numel).
    pre = flat if slab_elems == n else flat[:slab_elems]
    slab = pre.reshape(rows_total, LANES)
    tail = None if slab_elems == n else flat[slab_elems:]
    return slab, tail


def _pallas_sum(flat):
    """sum(flat) as f32 via the streaming kernel (tiny arrays fall back to XLA)."""
    slab, tail = _slab_and_tail(flat)
    if slab is None:
        return jnp.sum(flat, dtype=jnp.float32)
    rows_total = slab.shape[0]
    plan = _plan(rows_total, _row_align(slab.dtype))
    if plan is None:
        core = jnp.sum(slab, dtype=jnp.float32)
    else:
        tr, num_tiles, shards, tps = plan
        core = jnp.sum(_streaming_partials([slab], rows_total, tr, num_tiles, shards, tps))
    if tail is not None:
        core = core + jnp.sum(tail, dtype=jnp.float32)
    return core


@jax.jit
def template_loss(output, label):
    """Pallas TPU implementation of TemplateLoss.forward: output.sum() - label.sum()."""
    flat_out = output.reshape(-1)
    flat_lab = label.reshape(-1)

    if flat_out.shape[0] == flat_lab.shape[0]:
        slab_o, tail_o = _slab_and_tail(flat_out)
        slab_l, tail_l = _slab_and_tail(flat_lab)
        if slab_o is None:
            total = (jnp.sum(flat_out, dtype=jnp.float32)
                     - jnp.sum(flat_lab, dtype=jnp.float32))
        else:
            rows_total = slab_o.shape[0]
            # Align to the stricter (narrower-dtype) packing so both BlockSpecs are legal.
            align = max(_row_align(slab_o.dtype), _row_align(slab_l.dtype))
            plan = _plan(rows_total, align)
            if plan is None:
                total = (jnp.sum(slab_o, dtype=jnp.float32)
                         - jnp.sum(slab_l, dtype=jnp.float32))
            else:
                tr, num_tiles, shards, tps = plan
                partials = _streaming_partials([slab_o, slab_l], rows_total,
                                               tr, num_tiles, shards, tps)
                total = jnp.sum(partials)
            if tail_o is not None:
                total = (total + jnp.sum(tail_o, dtype=jnp.float32)
                         - jnp.sum(tail_l, dtype=jnp.float32))
    else:
        # Different element counts: two independent streaming sums.
        total = _pallas_sum(flat_out) - _pallas_sum(flat_lab)

    res_dtype = jnp.promote_types(output.dtype, label.dtype)
    if jnp.issubdtype(res_dtype, jnp.floating):
        total = total.astype(res_dtype)
    return total


if __name__ == "__main__":
    key = jax.random.PRNGKey(0)
    k_out, k_lab = jax.random.split(key)
    # small NCHW shapes consistent with a typical model output / label pair
    output = jax.random.normal(k_out, (2, 4, 16, 16), dtype=jnp.float32)
    label = jax.random.normal(k_lab, (2, 4, 16, 16), dtype=jnp.float32)

    loss = template_loss(output, label)
    loss = jax.block_until_ready(loss)

    ref = jnp.sum(output) - jnp.sum(label)
    assert jnp.allclose(loss, ref, atol=1e-4, rtol=1e-5), (loss, ref)
    print("KERNEL_OK")
</pallas_src>

<mosaic_0001>
module attributes {stable_mosaic.version = 11 : i64} {
  func.func @kernel(%arg0: i32, %arg1: i32, %arg2: memref<16x128xf32, #tpu.memory_space<vmem>>, %arg3: memref<16x128xf32, #tpu.memory_space<vmem>>, %arg4: memref<1x8x128xf32, #tpu.memory_space<vmem>>) attributes {dimension_semantics = [#tpu.dimension_semantics<parallel>, #tpu.dimension_semantics<arbitrary>], iteration_bounds = array<i64: 1, 1>, scalar_prefetch = 0 : i64, scratch_operands = 0 : i64, tpu.core_type = #tpu.core_type<tc>, window_params = [{transform_indices = @transform_0, window_bounds = array<i64: 16, 128>}, {transform_indices = @transform_1, window_bounds = array<i64: 16, 128>}, {transform_indices = @transform_2, window_bounds = array<i64: 1, 8, 128>}]} {
    %c0_i32 = arith.constant 0 : i32
    %0 = arith.cmpi eq, %arg1, %c0_i32 : i32
    %1 = arith.extui %0 : i1 to i32
    %c0_i32_0 = arith.constant 0 : i32
    %2 = arith.cmpi ne, %1, %c0_i32_0 : i32
    scf.if %2 {
      %cst_10 = arith.constant 0.000000e+00 : f32
      %14 = vector.broadcast %cst_10 : f32 to vector<8x128xf32>
      %c0_11 = arith.constant 0 : index
      %c0_12 = arith.constant 0 : index
      %c0_13 = arith.constant 0 : index
      %15 = vector.load %arg4[%c0_11, %c0_12, %c0_13] : memref<1x8x128xf32, #tpu.memory_space<vmem>>, vector<1x8x128xf32>
      %16 = vector.shape_cast %15 : vector<1x8x128xf32> to vector<8x128xf32>
      %17 = vector.shape_cast %14 : vector<8x128xf32> to vector<1x8x128xf32>
      tpu.vector_store %arg4[%c0_11, %c0_12, %c0_13], %17 {strides = array<i32>} : memref<1x8x128xf32, #tpu.memory_space<vmem>>, vector<1x8x128xf32>,
    } else {
    }
    %c0 = arith.constant 0 : index
    %c0_1 = arith.constant 0 : index
    %3 = vector.load %arg2[%c0, %c0_1] : memref<16x128xf32, #tpu.memory_space<vmem>>, vector<16x128xf32>
    %c0_2 = arith.constant 0 : index
    %c0_3 = arith.constant 0 : index
    %4 = vector.load %arg3[%c0_2, %c0_3] : memref<16x128xf32, #tpu.memory_space<vmem>>, vector<16x128xf32>
    %5 = arith.subf %3, %4 : vector<16x128xf32>
    %c0_4 = arith.constant 0 : index
    %c0_5 = arith.constant 0 : index
    %c0_6 = arith.constant 0 : index
    %6 = vector.load %arg4[%c0_4, %c0_5, %c0_6] : memref<1x8x128xf32, #tpu.memory_space<vmem>>, vector<1x8x128xf32>
    %7 = vector.shape_cast %6 : vector<1x8x128xf32> to vector<8x128xf32>
    %8 = vector.shape_cast %5 : vector<16x128xf32> to vector<2x8x128xf32>
    %cst = arith.constant dense<0.000000e+00> : vector<8x128xf32>
    %9 = vector.multi_reduction <add>, %8, %cst [0] : vector<2x8x128xf32> to vector<8x128xf32>
    %10 = arith.addf %7, %9 : vector<8x128xf32>
    %c0_7 = arith.constant 0 : index
    %c0_8 = arith.constant 0 : index
    %c0_9 = arith.constant 0 : index
    %11 = vector.load %arg4[%c0_7, %c0_8, %c0_9] : memref<1x8x128xf32, #tpu.memory_space<vmem>>, vector<1x8x128xf32>
    %12 = vector.shape_cast %11 : vector<1x8x128xf32> to vector<8x128xf32>
    %13 = vector.shape_cast %10 : vector<8x128xf32> to vector<1x8x128xf32>
    tpu.vector_store %arg4[%c0_7, %c0_8, %c0_9], %13 {strides = array<i32>} : memref<1x8x128xf32, #tpu.memory_space<vmem>>, vector<1x8x128xf32>,
    return
  }
  func.func @transform_0(%arg0: i32, %arg1: i32) -> (i32, i32) {
    %c1_i32 = arith.constant 1 : i32
    %0 = arith.muli %arg0, %c1_i32 : i32
    %1 = arith.addi %0, %arg1 : i32
    %c0_i32 = arith.constant 0 : i32
    %c0_i32_0 = arith.constant 0 : i32
    return %1, %c0_i32 : i32, i32
  }
  func.func @transform_1(%arg0: i32, %arg1: i32) -> (i32, i32) {
    %c1_i32 = arith.constant 1 : i32
    %0 = arith.muli %arg0, %c1_i32 : i32
    %1 = arith.addi %0, %arg1 : i32
    %c0_i32 = arith.constant 0 : i32
    %c0_i32_0 = arith.constant 0 : i32
    return %1, %c0_i32 : i32, i32
  }
  func.func @transform_2(%arg0: i32, %arg1: i32) -> (i32, i32, i32) {
    %c0_i32 = arith.constant 0 : i32
    %c0_i32_0 = arith.constant 0 : i32
    %c0_i32_1 = arith.constant 0 : i32
    return %arg0, %c0_i32, %c0_i32_0 : i32, i32, i32
  }
}

</mosaic_0001>

<llo_original>
// kernel: template_loss.1
$region0: #{template_loss.1}
  #allocation0 [shape = 'u32[]', space=smem, size = 0x4, offset = 0x4, fixed_abs, tag = 'smem constant byte address 0x4 - core index']
  #allocation1 [shape = 'u32[72,128]{1,0:T(1,128)}', space=vmem, size = 0x9000, scoped, tag = 'internal scratch']
  %s0 = inlined_call_operand.vmem [shape: f32[16,128], index: 0, kind: input, shape index: {}]
  %s1 = inlined_call_operand.vmem [shape: f32[16,128], index: 1, kind: input, shape index: {}]
  %s2 = inlined_call_operand.vmem [shape: f32[1,8,128], index: 2, kind: output, shape index: {}]
  %s3 = sld [smem:[#allocation0]]
  $region22: #{template_loss.1} parent=0
    _
  %s5 = ssub.s32 1, %s3
  %s6 = scalar_select 0, %s5, %s3
  // Predicated region
  $region2: #{template_loss.1} parent=0 // pred_check
    _
  $region3: #{template_loss.1} parent=0 // pred_check_branch
    %8 = sbr.rel (0) target = $region5
  $region4: #{template_loss.1} parent=0 // pred_region
    %s9 = sadd.s32 0, 0
    %s10 = smul.u32 2, %s9
    %p11 = scmp.lt.s32.totalorder %s10, 1
    %s12 = scalar_select %p11, %s10, 1
    %s13 = smul.addr %s12, 8
    %s14 = scalar_lea.vmem %s0, %s13
    %s15 = sadd.s32 0, 0
    %s16 = smul.u32 2, %s15
  $region5: #{template_loss.1} parent=0 // pred_fallthru
    _
  // Predicated region
  $region6: #{template_loss.1} parent=0 // pred_check
    _
  $region7: #{template_loss.1} parent=0 // pred_check_branch
    %18 = sbr.rel (0) target = $region9
  $region8: #{template_loss.1} parent=0 // pred_region
    %s19 = sadd.s32 0, 0
    %s20 = smul.u32 2, %s19
    %p21 = scmp.lt.s32.totalorder %s20, 1
    %s22 = scalar_select %p21, %s20, 1
    %s23 = smul.addr %s22, 8
    %s24 = scalar_lea.vmem %s1, %s23
    %s25 = sadd.s32 0, 0
    %s26 = smul.u32 2, %s25
  $region9: #{template_loss.1} parent=0 // pred_fallthru
    _
  %s27 = sadd.s32 0, 0
  %s28 = smul.u32 2, %s27
  %p29 = scmp.lt.s32.totalorder %s28, 1
  %s30 = scalar_select %p29, %s28, 1
  %s31 = smul.addr %s30, 8
  %s32 = scalar_lea.vmem %s0, %s31
  %s33 = sadd.s32 0, 0
  %s34 = smul.u32 2, %s33
  %p35 = scmp.lt.s32.totalorder %s34, 1
  %s36 = scalar_select %p35, %s34, 1
  %s37 = smul.addr %s36, 8
  %s38 = scalar_lea.vmem %s1, %s37
  %s39 = sadd.s32 0, 0
  %s40 = smul.u32 2, %s39
  %p41 = scmp.lt.s32.totalorder %s40, 1
  %s42 = scalar_select %p41, %s40, 1
  %s43 = smul.addr %s42, 8
  %s44 = scalar_lea.vmem %s0, %s43
  %s45 = sadd.s32 0, 0
  %s46 = smul.u32 2, %s45
  %s47 = sadd.s32 0, 0
  %s48 = smul.u32 2, %s47
  %p49 = scmp.lt.s32.totalorder %s48, 1
  %s50 = scalar_select %p49, %s48, 1
  %s51 = smul.addr %s50, 8
  %s52 = scalar_lea.vmem %s1, %s51
  %s53 = sadd.s32 0, 0
  %s54 = smul.u32 2, %s53
  %p55 = scmp.eq.s32.totalorder 0, 0
  // Predicated region
  $region10: #{template_loss.1} parent=0 // pred_check
    %p56 = pneg %p55
  $region11: #{template_loss.1} parent=0 // pred_check_branch
    %58 = sbr.rel (%p56) target = $region13
  $region12: #{template_loss.1} parent=0 // pred_region
    %59 = vst [vmem:[%s2] sm:$0xff] 0.0
  $region13: #{template_loss.1} parent=0 // pred_fallthru
    _
  %v60 = vld [vmem:[%s44] sm:$0xff]
  %v61 = vld [vmem:[%s44 + $0x8] sm:$0xff]
  %v62 = vld [vmem:[%s52] sm:$0xff]
  %v63 = vld [vmem:[%s52 + $0x8] sm:$0xff]
  %v64 = vsub.f32 %v60, %v62
  %v65 = vsub.f32 %v61, %v63
  %v66 = vld [vmem:[%s2] sm:$0xff]
  %v67 = vadd.f32 %v64, %v65
  %v68 = vadd.f32 %v66, %v67
  %69 = vst [vmem:[%s2] sm:$0xff] %v68
  // Predicated region
  $region14: #{template_loss.1} parent=0 // pred_check
    _
  $region15: #{template_loss.1} parent=0 // pred_check_branch
    %71 = sbr.rel (0) target = $region17
  $region16: #{template_loss.1} parent=0 // pred_region
    _
  $region17: #{template_loss.1} parent=0 // pred_fallthru
    _
  // Predicated region
  $region18: #{template_loss.1} parent=0 // pred_check
    _
  $region19: #{template_loss.1} parent=0 // pred_check_branch
    %73 = sbr.rel (0) target = $region21
  $region20: #{template_loss.1} parent=0 // pred_region
    _
  $region21: #{template_loss.1} parent=0 // pred_fallthru
    _

</llo_original>
